<compile_context>
chip_gen: v5e
topology: v5e:2x2
jax: 0.10.0
libtpu: 0.0.40
codegen_flags: <defaults>
</compile_context>

<pallas_src>
import jax
import jax.numpy as jnp
from jax.experimental import pallas as pl
from jax.experimental.pallas import tpu as pltpu


def qmix_agent_kernel(x_ref, w1_ref, b1_ref, w2_ref, b2_ref, w3_ref, b3_ref, o_ref):
    """Fused 3-layer MLP: relu(relu(x @ W1 + b1) @ W2 + b2) @ W3 + b3."""
    x = x_ref[...]
    h1 = jnp.dot(x, w1_ref[...], preferred_element_type=jnp.float32) + b1_ref[...]
    h1 = jnp.maximum(h1, 0.0)
    h2 = jnp.dot(h1, w2_ref[...], preferred_element_type=jnp.float32) + b2_ref[...]
    h2 = jnp.maximum(h2, 0.0)
    q = jnp.dot(h2, w3_ref[...], preferred_element_type=jnp.float32) + b3_ref[...]
    o_ref[...] = q.astype(o_ref.dtype)


def _round_up(x, m):
    return ((x + m - 1) // m) * m


def qmix_agent_forward(state, params, *, max_block_b=256):
    """Run the QMixAgent forward pass with a Pallas kernel.

    Small batches (<= max_block_b) run as a single grid step (whole batch in one
    block, no per-step overhead). Large batches are tiled over max_block_b rows
    with a "parallel" grid axis so v7x can shard across its two TensorCores.
    The action dimension is lane-padded to 128 inside this wrapper and sliced
    back, so the kernel's output stores are always lane-dense.
    """
    w1, b1, w2, b2, w3, b3 = params
    B, state_dim = state.shape
    hidden_dim = w1.shape[1]
    action_dim = w3.shape[1]

    # --- Lane-pad the final layer's output dimension to a multiple of 128. ---
    n_pad = _round_up(max(action_dim, 128), 128)
    if n_pad != action_dim:
        w3p = jnp.zeros((hidden_dim, n_pad), w3.dtype).at[:, :action_dim].set(w3)
        b3p = jnp.zeros((1, n_pad), b3.dtype).at[:, :action_dim].set(b3)
    else:
        w3p, b3p = w3, b3

    # --- Choose batch tile: whole (sublane-aligned) batch if small, else tiles. ---
    if B <= max_block_b:
        block_b = _round_up(B, 8)
    else:
        block_b = max_block_b
    B_pad = _round_up(B, block_b)
    if B_pad != B:
        state_p = jnp.zeros((B_pad, state_dim), state.dtype).at[:B, :].set(state)
    else:
        state_p = state

    grid = (B_pad // block_b,)
    full = lambda i: (0, 0)  # weights/biases: same (whole) block every grid step

    out = pl.pallas_call(
        qmix_agent_kernel,
        out_shape=jax.ShapeDtypeStruct((B_pad, n_pad), jnp.float32),
        grid=grid,
        in_specs=[
            pl.BlockSpec((block_b, state_dim), lambda i: (i, 0)),   # state tile
            pl.BlockSpec((state_dim, hidden_dim), full),            # W1
            pl.BlockSpec((1, hidden_dim), full),                    # b1
            pl.BlockSpec((hidden_dim, hidden_dim), full),           # W2
            pl.BlockSpec((1, hidden_dim), full),                    # b2
            pl.BlockSpec((hidden_dim, n_pad), full),                # W3 (lane-padded)
            pl.BlockSpec((1, n_pad), full),                         # b3 (lane-padded)
        ],
        out_specs=pl.BlockSpec((block_b, n_pad), lambda i: (i, 0)),
        compiler_params=pltpu.CompilerParams(
            dimension_semantics=("parallel",),
        ),
    )(state_p, w1, b1, w2, b2, w3p, b3p)

    # Slice off batch padding and the lane padding of the action dimension.
    return out[:B, :action_dim]


def xavier_uniform(key, fan_in, fan_out, dtype=jnp.float32):
    """Matches torch.nn.init.xavier_uniform_ (gain=1)."""
    limit = jnp.sqrt(6.0 / (fan_in + fan_out)).astype(dtype)
    return jax.random.uniform(key, (fan_in, fan_out), dtype, minval=-limit, maxval=limit)


def init_qmix_agent_params(key, state_dim, action_dim, hidden_dim):
    k1, k2, k3 = jax.random.split(key, 3)
    w1 = xavier_uniform(k1, state_dim, hidden_dim)
    w2 = xavier_uniform(k2, hidden_dim, hidden_dim)
    w3 = xavier_uniform(k3, hidden_dim, action_dim)
    # PyTorch: module.bias.data.fill_(0.01)
    b1 = jnp.full((1, hidden_dim), 0.01, jnp.float32)
    b2 = jnp.full((1, hidden_dim), 0.01, jnp.float32)
    b3 = jnp.full((1, action_dim), 0.01, jnp.float32)
    return (w1, b1, w2, b2, w3, b3)


def qmix_agent_reference(state, params):
    """Pure-JAX reference for correctness check."""
    w1, b1, w2, b2, w3, b3 = params
    h1 = jnp.maximum(state @ w1 + b1, 0.0)
    h2 = jnp.maximum(h1 @ w2 + b2, 0.0)
    return h2 @ w3 + b3


if __name__ == "__main__":
    # Small shapes consistent with QMixAgent(state_dim, action_dim, hidden_dim=128)
    batch = 16
    state_dim = 32
    action_dim = 8
    hidden_dim = 128

    key = jax.random.PRNGKey(0)
    k_params, k_state = jax.random.split(key)

    params = init_qmix_agent_params(k_params, state_dim, action_dim, hidden_dim)
    state = jax.random.normal(k_state, (batch, state_dim), jnp.float32)

    q_values = qmix_agent_forward(state, params)
    q_values = jax.block_until_ready(q_values)

    # sanity check against plain-JAX reference
    q_ref = qmix_agent_reference(state, params)
    assert q_values.shape == (batch, action_dim)
    assert jnp.allclose(q_values, q_ref, atol=1e-5, rtol=1e-5), "mismatch vs reference"

    print("KERNEL_OK")
</pallas_src>

<mosaic_0001>
module attributes {stable_mosaic.version = 11 : i64} {
  func.func @qmix_agent_kernel(%arg0: i32, %arg1: memref<16x32xf32, #tpu.memory_space<vmem>>, %arg2: memref<32x128xf32, #tpu.memory_space<vmem>>, %arg3: memref<1x128xf32, #tpu.memory_space<vmem>>, %arg4: memref<128x128xf32, #tpu.memory_space<vmem>>, %arg5: memref<1x128xf32, #tpu.memory_space<vmem>>, %arg6: memref<128x128xf32, #tpu.memory_space<vmem>>, %arg7: memref<1x128xf32, #tpu.memory_space<vmem>>, %arg8: memref<16x128xf32, #tpu.memory_space<vmem>>) attributes {dimension_semantics = [#tpu.dimension_semantics<parallel>], iteration_bounds = array<i64: 1>, scalar_prefetch = 0 : i64, scratch_operands = 0 : i64, tpu.core_type = #tpu.core_type<tc>, window_params = [{transform_indices = @transform_0, window_bounds = array<i64: 16, 32>}, {pipeline_mode = #tpu.pipeline_mode<synchronous>, transform_indices = @transform_1, window_bounds = array<i64: 32, 128>}, {pipeline_mode = #tpu.pipeline_mode<synchronous>, transform_indices = @transform_2, window_bounds = array<i64: 1, 128>}, {pipeline_mode = #tpu.pipeline_mode<synchronous>, transform_indices = @transform_3, window_bounds = array<i64: 128, 128>}, {pipeline_mode = #tpu.pipeline_mode<synchronous>, transform_indices = @transform_4, window_bounds = array<i64: 1, 128>}, {pipeline_mode = #tpu.pipeline_mode<synchronous>, transform_indices = @transform_5, window_bounds = array<i64: 128, 128>}, {pipeline_mode = #tpu.pipeline_mode<synchronous>, transform_indices = @transform_6, window_bounds = array<i64: 1, 128>}, {transform_indices = @transform_7, window_bounds = array<i64: 16, 128>}]} {
    %c0 = arith.constant 0 : index
    %c0_0 = arith.constant 0 : index
    %0 = vector.load %arg1[%c0, %c0_0] : memref<16x32xf32, #tpu.memory_space<vmem>>, vector<16x32xf32>
    %c0_1 = arith.constant 0 : index
    %c0_2 = arith.constant 0 : index
    %1 = vector.load %arg2[%c0_1, %c0_2] : memref<32x128xf32, #tpu.memory_space<vmem>>, vector<32x128xf32>
    %cst = arith.constant dense<0.000000e+00> : vector<16x128xf32>
    %2 = tpu.matmul %0, %1, %cst {dimension_numbers = #tpu.dot_dimension_numbers<[1], [0], [0], [1], [0, 0, 1, 1], [], []>} : vector<16x32xf32>, vector<32x128xf32>, vector<16x128xf32> -> vector<16x128xf32>
    %c0_3 = arith.constant 0 : index
    %c0_4 = arith.constant 0 : index
    %3 = vector.load %arg3[%c0_3, %c0_4] : memref<1x128xf32, #tpu.memory_space<vmem>>, vector<1x128xf32>
    %4 = vector.broadcast %3 : vector<1x128xf32> to vector<16x128xf32>
    %5 = arith.addf %2, %4 : vector<16x128xf32>
    %cst_5 = arith.constant 0.000000e+00 : f32
    %6 = vector.broadcast %cst_5 : f32 to vector<16x128xf32>
    %7 = arith.maximumf %5, %6 : vector<16x128xf32>
    %c0_6 = arith.constant 0 : index
    %c0_7 = arith.constant 0 : index
    %8 = vector.load %arg4[%c0_6, %c0_7] : memref<128x128xf32, #tpu.memory_space<vmem>>, vector<128x128xf32>
    %cst_8 = arith.constant dense<0.000000e+00> : vector<16x128xf32>
    %9 = tpu.matmul %7, %8, %cst_8 {dimension_numbers = #tpu.dot_dimension_numbers<[1], [0], [0], [1], [0, 0, 1, 1], [], []>} : vector<16x128xf32>, vector<128x128xf32>, vector<16x128xf32> -> vector<16x128xf32>
    %c0_9 = arith.constant 0 : index
    %c0_10 = arith.constant 0 : index
    %10 = vector.load %arg5[%c0_9, %c0_10] : memref<1x128xf32, #tpu.memory_space<vmem>>, vector<1x128xf32>
    %11 = vector.broadcast %10 : vector<1x128xf32> to vector<16x128xf32>
    %12 = arith.addf %9, %11 : vector<16x128xf32>
    %cst_11 = arith.constant 0.000000e+00 : f32
    %13 = vector.broadcast %cst_11 : f32 to vector<16x128xf32>
    %14 = arith.maximumf %12, %13 : vector<16x128xf32>
    %c0_12 = arith.constant 0 : index
    %c0_13 = arith.constant 0 : index
    %15 = vector.load %arg6[%c0_12, %c0_13] : memref<128x128xf32, #tpu.memory_space<vmem>>, vector<128x128xf32>
    %cst_14 = arith.constant dense<0.000000e+00> : vector<16x128xf32>
    %16 = tpu.matmul %14, %15, %cst_14 {dimension_numbers = #tpu.dot_dimension_numbers<[1], [0], [0], [1], [0, 0, 1, 1], [], []>} : vector<16x128xf32>, vector<128x128xf32>, vector<16x128xf32> -> vector<16x128xf32>
    %c0_15 = arith.constant 0 : index
    %c0_16 = arith.constant 0 : index
    %17 = vector.load %arg7[%c0_15, %c0_16] : memref<1x128xf32, #tpu.memory_space<vmem>>, vector<1x128xf32>
    %18 = vector.broadcast %17 : vector<1x128xf32> to vector<16x128xf32>
    %19 = arith.addf %16, %18 : vector<16x128xf32>
    %c0_17 = arith.constant 0 : index
    %c0_18 = arith.constant 0 : index
    %20 = vector.load %arg8[%c0_17, %c0_18] : memref<16x128xf32, #tpu.memory_space<vmem>>, vector<16x128xf32>
    tpu.vector_store %arg8[%c0_17, %c0_18], %19 {strides = array<i32>} : memref<16x128xf32, #tpu.memory_space<vmem>>, vector<16x128xf32>,
    return
  }
  func.func @transform_0(%arg0: i32) -> (i32, i32) {
    %c0_i32 = arith.constant 0 : i32
    %c0_i32_0 = arith.constant 0 : i32
    return %arg0, %c0_i32 : i32, i32
  }
  func.func @transform_1(%arg0: i32) -> (i32, i32) {
    %c0_i32 = arith.constant 0 : i32
    %c0_i32_0 = arith.constant 0 : i32
    %c0_i32_1 = arith.constant 0 : i32
    return %c0_i32, %c0_i32_0 : i32, i32
  }
  func.func @transform_2(%arg0: i32) -> (i32, i32) {
    %c0_i32 = arith.constant 0 : i32
    %c0_i32_0 = arith.constant 0 : i32
    %c0_i32_1 = arith.constant 0 : i32
    return %c0_i32, %c0_i32_0 : i32, i32
  }
  func.func @transform_3(%arg0: i32) -> (i32, i32) {
    %c0_i32 = arith.constant 0 : i32
    %c0_i32_0 = arith.constant 0 : i32
    %c0_i32_1 = arith.constant 0 : i32
    return %c0_i32, %c0_i32_0 : i32, i32
  }
  func.func @transform_4(%arg0: i32) -> (i32, i32) {
    %c0_i32 = arith.constant 0 : i32
    %c0_i32_0 = arith.constant 0 : i32
    %c0_i32_1 = arith.constant 0 : i32
    return %c0_i32, %c0_i32_0 : i32, i32
  }
  func.func @transform_5(%arg0: i32) -> (i32, i32) {
    %c0_i32 = arith.constant 0 : i32
    %c0_i32_0 = arith.constant 0 : i32
    %c0_i32_1 = arith.constant 0 : i32
    return %c0_i32, %c0_i32_0 : i32, i32
  }
  func.func @transform_6(%arg0: i32) -> (i32, i32) {
    %c0_i32 = arith.constant 0 : i32
    %c0_i32_0 = arith.constant 0 : i32
    %c0_i32_1 = arith.constant 0 : i32
    return %c0_i32, %c0_i32_0 : i32, i32
  }
  func.func @transform_7(%arg0: i32) -> (i32, i32) {
    %c0_i32 = arith.constant 0 : i32
    %c0_i32_0 = arith.constant 0 : i32
    return %arg0, %c0_i32 : i32, i32
  }
}

</mosaic_0001>

<llo_original>
// kernel: tpu_custom_call.1
$region0: #{tpu_custom_call.1}
  #allocation0 [shape = 'u32[]', space=smem, size = 0x4, offset = 0x4, fixed_abs, tag = 'smem constant byte address 0x4 - core index']
  #allocation1 [shape = 'u32[72,128]{1,0:T(1,128)}', space=vmem, size = 0x9000, scoped, tag = 'internal scratch']
  %s0 = inlined_call_operand.hbm [shape: f32[16,32], index: 0, kind: input, shape index: {}]
  %s1 = inlined_call_operand.hbm [shape: f32[32,128], index: 1, kind: input, shape index: {}]
  %s2 = inlined_call_operand.vmem [shape: f32[1,128], index: 2, kind: input, shape index: {}]
  %s3 = inlined_call_operand.hbm [shape: f32[128,128], index: 3, kind: input, shape index: {}]
  %s4 = inlined_call_operand.vmem [shape: f32[1,128], index: 4, kind: input, shape index: {}]
  %s5 = inlined_call_operand.hbm [shape: f32[128,128], index: 5, kind: input, shape index: {}]
  %s6 = inlined_call_operand.vmem [shape: f32[1,128], index: 6, kind: input, shape index: {}]
  %s7 = inlined_call_operand.hbm [shape: f32[16,128], index: 7, kind: output, shape index: {}]
  %s8 = sld [smem:[#allocation0]]
  $region54: #{tpu_custom_call.1} parent=0
    _
  %s10 = ssub.s32 1, %s8
  %s11 = scalar_select 0, %s10, %s8
  $region1: #{tpu_custom_call.1} parent=0
    #allocation2 [shape = 'u8[8192]{0}', space=vmem, size = 0x2000, scoped, tag = 'input window, operand 0, single buffered']
    #allocation3 [shape = 's32[1]{0}', space=sflag, size = 0x4, scoped, tag = 'scoped memory for tpu_custom_call.1']
    #allocation4 [shape = 's32[1]{0}', space=sflag, size = 0x4, scoped, tag = 'scoped memory for tpu_custom_call.1']
    #allocation5 [shape = 'u8[16384]{0}', space=vmem, size = 0x4000, scoped, tag = 'input window, operand 1, single buffered']
    #allocation6 [shape = 's32[1]{0}', space=sflag, size = 0x4, scoped, tag = 'scoped memory for tpu_custom_call.1']
    #allocation7 [shape = 'u8[65536]{0}', space=vmem, size = 0x10000, scoped, tag = 'input window, operand 3, single buffered']
    #allocation8 [shape = 'u8[65536]{0}', space=vmem, size = 0x10000, scoped, tag = 'input window, operand 5, single buffered']
    #allocation9 [shape = 's32[1]{0}', space=sflag, size = 0x4, scoped, tag = 'scoped memory for tpu_custom_call.1']
    #allocation10 [shape = 'u8[8192]{0}', space=vmem, size = 0x2000, scoped, tag = 'output window, operand 0, single buffered']
    %12 = vsyncpa [#allocation3], 0
    %13 = vsyncpa [#allocation6], 0
    %14 = vsyncpa [#allocation9], 0
    %15 = vsyncpa [#allocation4], 0
    // Predicated region
    $region2: #{tpu_custom_call.1} parent=1 // pred_check
      _
    $region3: #{tpu_custom_call.1} parent=1 // pred_check_branch
      %17 = sbr.rel (0) target = $region5
    $region4: #{tpu_custom_call.1} parent=1 // pred_region
      %19 = vsyncadd [#allocation3], 0
      %s20 = sshll.u32 %s0, 4
      %s21 = int_to_ptr.hbm [resolvable:$true] %s20
      %s22 = sshll.u32 [#allocation2], 4
      %s23 = int_to_ptr.vmem [resolvable:$true] %s22
      %28 = dma.hbm_to_vmem [thread:$0]  %s21, 256, %s23, [#allocation3], 128, 128, 8
    $region5: #{tpu_custom_call.1} parent=1 // pred_fallthru
      _
    // Predicated region
    $region6: #{tpu_custom_call.1} parent=1 // pred_check
      _
    $region7: #{tpu_custom_call.1} parent=1 // pred_check_branch
      %30 = sbr.rel (0) target = $region9
    $region8: #{tpu_custom_call.1} parent=1 // pred_region
      %32 = vsyncadd [#allocation6], 0
      %s33 = sshll.u32 %s1, 4
      %s34 = int_to_ptr.hbm [resolvable:$true] %s33
      %s35 = sshll.u32 [#allocation5], 4
      %s36 = int_to_ptr.vmem [resolvable:$true] %s35
      %41 = dma.hbm_to_vmem [thread:$0]  %s34, 512, %s36, [#allocation6], 128, 128, 8
    $region9: #{tpu_custom_call.1} parent=1 // pred_fallthru
      _
    // Predicated region
    $region10: #{tpu_custom_call.1} parent=1 // pred_check
      _
    $region11: #{tpu_custom_call.1} parent=1 // pred_check_branch
      %43 = sbr.rel (0) target = $region13
    $region12: #{tpu_custom_call.1} parent=1 // pred_region
      _
    $region13: #{tpu_custom_call.1} parent=1 // pred_fallthru
      _
    // Predicated region
    $region14: #{tpu_custom_call.1} parent=1 // pred_check
      _
    $region15: #{tpu_custom_call.1} parent=1 // pred_check_branch
      %45 = sbr.rel (0) target = $region17
    $region16: #{tpu_custom_call.1} parent=1 // pred_region
      %47 = vsyncadd [#allocation6], 0
      %s48 = sshll.u32 %s3, 4
      %s49 = int_to_ptr.hbm [resolvable:$true] %s48
      %s50 = sshll.u32 [#allocation7], 4
      %s51 = int_to_ptr.vmem [resolvable:$true] %s50
      %56 = dma.hbm_to_vmem [thread:$0]  %s49, 2048, %s51, [#allocation6], 128, 128, 8
    $region17: #{tpu_custom_call.1} parent=1 // pred_fallthru
      _
    // Predicated region
    $region18: #{tpu_custom_call.1} parent=1 // pred_check
      _
    $region19: #{tpu_custom_call.1} parent=1 // pred_check_branch
      %58 = sbr.rel (0) target = $region21
    $region20: #{tpu_custom_call.1} parent=1 // pred_region
      _
    $region21: #{tpu_custom_call.1} parent=1 // pred_fallthru
      _
    // Predicated region
    $region22: #{tpu_custom_call.1} parent=1 // pred_check
      _
    $region23: #{tpu_custom_call.1} parent=1 // pred_check_branch
      %60 = sbr.rel (0) target = $region25
    $region24: #{tpu_custom_call.1} parent=1 // pred_region
      %62 = vsyncadd [#allocation9], 0
      %s63 = sshll.u32 %s5, 4
      %s64 = int_to_ptr.hbm [resolvable:$true] %s63
      %s65 = sshll.u32 [#allocation8], 4
      %s66 = int_to_ptr.vmem [resolvable:$true] %s65
      %71 = dma.hbm_to_vmem [thread:$0]  %s64, 2048, %s66, [#allocation9], 128, 128, 8
    $region25: #{tpu_custom_call.1} parent=1 // pred_fallthru
      _
    // Predicated region
    $region26: #{tpu_custom_call.1} parent=1 // pred_check
      _
    $region27: #{tpu_custom_call.1} parent=1 // pred_check_branch
      %73 = sbr.rel (0) target = $region29
    $region28: #{tpu_custom_call.1} parent=1 // pred_region
      _
    $region29: #{tpu_custom_call.1} parent=1 // pred_fallthru
      _
    // Predicated region
    $region30: #{tpu_custom_call.1} parent=1 // pred_check
      _
    $region31: #{tpu_custom_call.1} parent=1 // pred_check_branch
      %75 = sbr.rel (0) target = $region33
    $region32: #{tpu_custom_call.1} parent=1 // pred_region
      %77 = dma.done [#allocation3], 256
    $region33: #{tpu_custom_call.1} parent=1 // pred_fallthru
      _
    // Predicated region
    $region34: #{tpu_custom_call.1} parent=1 // pred_check
      _
    $region35: #{tpu_custom_call.1} parent=1 // pred_check_branch
      %79 = sbr.rel (0) target = $region37
    $region36: #{tpu_custom_call.1} parent=1 // pred_region
      %81 = dma.done [#allocation6], 512
    $region37: #{tpu_custom_call.1} parent=1 // pred_fallthru
      _
    // Predicated region
    $region38: #{tpu_custom_call.1} parent=1 // pred_check
      _
    $region39: #{tpu_custom_call.1} parent=1 // pred_check_branch
      %83 = sbr.rel (0) target = $region41
    $region40: #{tpu_custom_call.1} parent=1 // pred_region
      %85 = dma.done [#allocation6], 2048
    $region41: #{tpu_custom_call.1} parent=1 // pred_fallthru
      _
    // Predicated region
    $region42: #{tpu_custom_call.1} parent=1 // pred_check
      _
    $region43: #{tpu_custom_call.1} parent=1 // pred_check_branch
      %87 = sbr.rel (0) target = $region45
    $region44: #{tpu_custom_call.1} parent=1 // pred_region
      %89 = dma.done [#allocation9], 2048
    $region45: #{tpu_custom_call.1} parent=1 // pred_fallthru
      _
    %v90 = vld [vmem:[#allocation2] sm:$0xff]
    %v91 = vld [vmem:[#allocation2 + $0x8] sm:$0xff]
    %v92 = vld [vmem:[#allocation5] sm:$0xff]
    %v93 = vld [vmem:[#allocation5 + $0x8] sm:$0xff]
    %v94 = vld [vmem:[#allocation5 + $0x10] sm:$0xff]
    %v95 = vld [vmem:[#allocation5 + $0x18] sm:$0xff]
    %v96 = vld [vmem:[%s2] sm:$0x1]
    %v98 = vperm.slane %v96, 0
    %vm100 = vcmask 261120
    %v102 = vsel %vm100, %v90, 0
    %v105 = vsel %vm100, %v91, 0
    %107 = vmatpush.msra.mxu0 0.0
    %108 = vmatpush.msra.mxu0 0.0
    %109 = vmatpush.msra.mxu0 0.0
    %110 = vmatpush.msra.mxu0 0.0
    %111 = vmatpush.msra.mxu0 0.0
    %112 = vmatpush.msra.mxu0 0.0
    %113 = vmatpush.msra.mxu0 0.0
    %114 = vmatpush.msra.mxu0 0.0
    %115 = vmatpush.msra.mxu0 0.0
    %116 = vmatpush.msra.mxu0 0.0
    %117 = vmatpush.msra.mxu0 0.0
    %118 = vmatpush.msra.mxu0 0.0
    %119 = vmatpush.msra.mxu0 %v95
    %120 = vmatpush.msra.mxu0 %v94
    %121 = vmatpush.msra.mxu0 %v93
    %122 = vmatpush.msra.mxu0 %v92
    %123 = vmatmul.f32.gmra.mxu0 %v102
    %v124 = vpop.f32.mrf.mxu0
    %v125 = vadd.f32 %v98, %v124
    %126 = vmatmul.f32.gmra.mxu0 %v105
    %v127 = vpop.f32.mrf.mxu0
    %v128 = vadd.f32 %v98, %v127
    %129 = vdwg.mxu0
    %v130 = vmax.f32 %v125, 0.0
    %v131 = vmax.f32 %v128, 0.0
    %v132 = vld [vmem:[#allocation7] sm:$0xff]
    %v133 = vld [vmem:[#allocation7 + $0x8] sm:$0xff]
    %v134 = vld [vmem:[#allocation7 + $0x10] sm:$0xff]
    %v135 = vld [vmem:[#allocation7 + $0x18] sm:$0xff]
    %v136 = vld [vmem:[#allocation7 + $0x20] sm:$0xff]
    %v137 = vld [vmem:[#allocation7 + $0x28] sm:$0xff]
    %v138 = vld [vmem:[#allocation7 + $0x30] sm:$0xff]
    %v139 = vld [vmem:[#allocation7 + $0x38] sm:$0xff]
    %v140 = vld [vmem:[#allocation7 + $0x40] sm:$0xff]
    %v141 = vld [vmem:[#allocation7 + $0x48] sm:$0xff]
    %v142 = vld [vmem:[#allocation7 + $0x50] sm:$0xff]
    %v143 = vld [vmem:[#allocation7 + $0x58] sm:$0xff]
    %v144 = vld [vmem:[#allocation7 + $0x60] sm:$0xff]
    %v145 = vld [vmem:[#allocation7 + $0x68] sm:$0xff]
    %v146 = vld [vmem:[#allocation7 + $0x70] sm:$0xff]
    %v147 = vld [vmem:[#allocation7 + $0x78] sm:$0xff]
    %v148 = vld [vmem:[%s4] sm:$0x1]
    %v150 = vperm.slane %v148, 0
    %152 = vmatpush.msra.mxu0 %v147
    %153 = vmatpush.msra.mxu0 %v146
    %154 = vmatpush.msra.mxu0 %v145
    %155 = vmatpush.msra.mxu0 %v144
    %156 = vmatpush.msra.mxu0 %v143
    %157 = vmatpush.msra.mxu0 %v142
    %158 = vmatpush.msra.mxu0 %v141
    %159 = vmatpush.msra.mxu0 %v140
    %160 = vmatpush.msra.mxu0 %v139
    %161 = vmatpush.msra.mxu0 %v138
    %162 = vmatpush.msra.mxu0 %v137
    %163 = vmatpush.msra.mxu0 %v136
    %164 = vmatpush.msra.mxu0 %v135
    %165 = vmatpush.msra.mxu0 %v134
    %166 = vmatpush.msra.mxu0 %v133
    %167 = vmatpush.msra.mxu0 %v132
    %168 = vmatmul.f32.gmra.mxu0 %v130
    %v169 = vpop.f32.mrf.mxu0
    %v170 = vadd.f32 %v150, %v169
    %171 = vmatmul.f32.gmra.mxu0 %v131
    %v172 = vpop.f32.mrf.mxu0
    %v173 = vadd.f32 %v150, %v172
    %174 = vdwg.mxu0
    %v175 = vmax.f32 %v170, 0.0
    %v176 = vmax.f32 %v173, 0.0
    %v177 = vld [vmem:[#allocation8] sm:$0xff]
    %v178 = vld [vmem:[#allocation8 + $0x8] sm:$0xff]
    %v179 = vld [vmem:[#allocation8 + $0x10] sm:$0xff]
    %v180 = vld [vmem:[#allocation8 + $0x18] sm:$0xff]
    %v181 = vld [vmem:[#allocation8 + $0x20] sm:$0xff]
    %v182 = vld [vmem:[#allocation8 + $0x28] sm:$0xff]
    %v183 = vld [vmem:[#allocation8 + $0x30] sm:$0xff]
    %v184 = vld [vmem:[#allocation8 + $0x38] sm:$0xff]
    %v185 = vld [vmem:[#allocation8 + $0x40] sm:$0xff]
    %v186 = vld [vmem:[#allocation8 + $0x48] sm:$0xff]
    %v187 = vld [vmem:[#allocation8 + $0x50] sm:$0xff]
    %v188 = vld [vmem:[#allocation8 + $0x58] sm:$0xff]
    %v189 = vld [vmem:[#allocation8 + $0x60] sm:$0xff]
    %v190 = vld [vmem:[#allocation8 + $0x68] sm:$0xff]
    %v191 = vld [vmem:[#allocation8 + $0x70] sm:$0xff]
    %v192 = vld [vmem:[#allocation8 + $0x78] sm:$0xff]
    %v193 = vld [vmem:[%s6] sm:$0x1]
    %v195 = vperm.slane %v193, 0
    %197 = vmatpush.msra.mxu0 %v192
    %198 = vmatpush.msra.mxu0 %v191
    %199 = vmatpush.msra.mxu0 %v190
    %200 = vmatpush.msra.mxu0 %v189
    %201 = vmatpush.msra.mxu0 %v188
    %202 = vmatpush.msra.mxu0 %v187
    %203 = vmatpush.msra.mxu0 %v186
    %204 = vmatpush.msra.mxu0 %v185
    %205 = vmatpush.msra.mxu0 %v184
    %206 = vmatpush.msra.mxu0 %v183
    %207 = vmatpush.msra.mxu0 %v182
    %208 = vmatpush.msra.mxu0 %v181
    %209 = vmatpush.msra.mxu0 %v180
    %210 = vmatpush.msra.mxu0 %v179
    %211 = vmatpush.msra.mxu0 %v178
    %212 = vmatpush.msra.mxu0 %v177
    %213 = vmatmul.f32.gmra.mxu0 %v175
    %v214 = vpop.f32.mrf.mxu0
    %v215 = vadd.f32 %v195, %v214
    %216 = vmatmul.f32.gmra.mxu0 %v176
    %v217 = vpop.f32.mrf.mxu0
    %v218 = vadd.f32 %v195, %v217
    %219 = vdwg.mxu0
    %220 = vst [vmem:[#allocation10] sm:$0xff] %v215
    %221 = vst [vmem:[#allocation10 + $0x8] sm:$0xff] %v218
    // Predicated region
    $region46: #{tpu_custom_call.1} parent=1 // pred_check
      _
    $region47: #{tpu_custom_call.1} parent=1 // pred_check_branch
      %223 = sbr.rel (0) target = $region49
    $region48: #{tpu_custom_call.1} parent=1 // pred_region
      %225 = vsyncadd [#allocation4], 0
      %s226 = sshll.u32 [#allocation10], 4
      %s227 = int_to_ptr.vmem [resolvable:$true] %s226
      %s228 = sshll.u32 %s7, 4
      %s229 = int_to_ptr.hbm [resolvable:$true] %s228
      %234 = dma.vmem_to_hbm [thread:$0]  %s227, 256, %s229, [#allocation4], 128, 128, 8
    $region49: #{tpu_custom_call.1} parent=1 // pred_fallthru
      _
    // Predicated region
    $region50: #{tpu_custom_call.1} parent=1 // pred_check
      _
    $region51: #{tpu_custom_call.1} parent=1 // pred_check_branch
      %236 = sbr.rel (0) target = $region53
    $region52: #{tpu_custom_call.1} parent=1 // pred_region
      %238 = dma.done [#allocation4], 256
    $region53: #{tpu_custom_call.1} parent=1 // pred_fallthru
      _
    %239 = vsyncpa [#allocation3], 1
    %240 = vsyncpa [#allocation6], 1
    %241 = vsyncpa [#allocation9], 1
    %242 = vsyncpa [#allocation4], 1

</llo_original>
